<compile_context>
chip_gen: v5e
topology: v5e:2x2
jax: 0.10.0
libtpu: 0.0.40
codegen_flags: <defaults>
</compile_context>

<pallas_src>
import functools

import jax
import jax.numpy as jnp
from jax.experimental import pallas as pl
from jax.experimental.pallas import tpu as pltpu

LN_EPS = 1e-5


# ----------------------------------------------------------------------------
# Fused Encoder kernel.
#
# Grid (b, l):
#   every step: LayerNorm(hidden_states[l, b]) (bf16 -> f32), scale by the
#               softmax-folded gamma_l/beta_l and accumulate into a VMEM-
#               resident (T, D) f32 accumulator.
#   last layer: one-hot MXU scatter over the (padded) word axis, then the
#               framework-selected query matmul + bias + tanh; write outputs.
# ----------------------------------------------------------------------------
def _encoder_kernel(fw_ref, ts_ref, gamma_ref, beta_ref, hs_ref,
                    qgw_ref, qgb_ref, enc_out_ref, dec_out_ref, acc_ref):
    del fw_ref  # framework selection happens in the qg_weight/qg_bias index_maps
    l = pl.program_id(1)
    n_layers = pl.num_programs(1)

    T, D = acc_ref.shape
    n_words_pad = enc_out_ref.shape[1]

    # ---- per-layer LayerNorm (two-pass variance, f32 stats on bf16 input) ---
    x = hs_ref[0, 0].astype(jnp.float32)               # (T, D)
    inv_d = 1.0 / D
    mean = jnp.sum(x, axis=-1, keepdims=True) * inv_d
    xc = x - mean
    var = jnp.sum(xc * xc, axis=-1, keepdims=True) * inv_d
    xn = xc * jax.lax.rsqrt(var + LN_EPS)

    # softmax layer weight is pre-folded into gamma_l / beta_l on the host.
    contrib = xn * gamma_ref[0] + beta_ref[0]           # (T, D)

    @pl.when(l == 0)
    def _():
        acc_ref[...] = contrib                          # no zero-fill + RMW

    @pl.when(l > 0)
    def _():
        acc_ref[...] += contrib

    # ---- finalize: one-hot scatter + QueryGenerator -------------------------
    @pl.when(l == n_layers - 1)
    def _():
        enc = acc_ref[...]                              # (T, D) f32

        # scatter_add over the word axis as a one-hot matmul (MXU).
        # to_scatter is padded so [CLS]/[SEP] hit a sentinel row (> all rows)
        # and the drop bucket lands in the padded region that is sliced off on
        # the host — no activation slices needed.
        idx = ts_ref[0]                                 # (1, T) int32
        rows = jax.lax.broadcasted_iota(jnp.int32, (n_words_pad, T), 0)
        onehot = (rows == idx).astype(jnp.float32)      # (n_words_pad, T)
        out = jnp.dot(onehot, enc, preferred_element_type=jnp.float32)
        enc_out_ref[0] = out                            # (n_words_pad, D)

        # QueryGenerator: the framework-selected (D, WD) slice was DMA'd by the
        # BlockSpec index_map (scalar-prefetch on `frameworks`).
        w = qgw_ref[0]                                  # (D, WD)
        bias = qgb_ref[0]                               # (1, WD)
        q = jnp.dot(out, w, preferred_element_type=jnp.float32) + bias
        dec_out_ref[0] = jnp.tanh(q)                    # (n_words_pad, WD)


def encoder_forward(params, hidden_states, to_scatter, n_words, frameworks,
                    width_factor):
    """Eval-mode Encoder.forward. Returns (encoder_output, decoder_input).

    hidden_states: (L, B, T, D), preferably bf16 (upcast in-kernel).
    """
    L, B, T, D = hidden_states.shape
    n_fw, _, WD = params["qg_weight"].shape
    n_words_pad = ((n_words + 7) // 8) * 8              # sublane-dense outputs

    # softmax over the (L,1,1,1) `scores` parameter, folded into the LN affine.
    lw = jax.nn.softmax(params["scores"].reshape(L).astype(jnp.float32))
    gamma = params["ln_gamma"].reshape(1, 1, D).astype(jnp.float32)
    beta = params["ln_beta"].reshape(1, 1, D).astype(jnp.float32)
    gamma_l = lw.reshape(L, 1, 1) * gamma               # (L, 1, D)
    beta_l = lw.reshape(L, 1, 1) * beta                 # (L, 1, D)

    # Pad to_scatter to full T: sentinel (n_words_pad, never matches a one-hot
    # row) at [CLS]/[SEP]; real drop-bucket ids (n_words) land in the padded
    # region which is sliced off below. Tiny int32 host-side op.
    ts = jnp.full((B, T), n_words_pad, dtype=jnp.int32)
    ts = ts.at[:, 1:T - 1].set(to_scatter.astype(jnp.int32))
    ts = ts.reshape(B, 1, T)

    grid_spec = pltpu.PrefetchScalarGridSpec(
        num_scalar_prefetch=1,                          # frameworks -> SMEM
        grid=(B, L),
        in_specs=[
            pl.BlockSpec((1, 1, T), lambda b, l, fw: (b, 0, 0)),        # to_scatter
            pl.BlockSpec((1, 1, D), lambda b, l, fw: (l, 0, 0)),        # gamma_l
            pl.BlockSpec((1, 1, D), lambda b, l, fw: (l, 0, 0)),        # beta_l
            pl.BlockSpec((1, 1, T, D), lambda b, l, fw: (l, b, 0, 0)),  # hidden (bf16)
            pl.BlockSpec((1, D, WD), lambda b, l, fw: (fw[b], 0, 0)),   # qg weight slice
            pl.BlockSpec((1, 1, WD), lambda b, l, fw: (fw[b], 0, 0)),   # qg bias slice
        ],
        out_specs=[
            pl.BlockSpec((1, n_words_pad, D), lambda b, l, fw: (b, 0, 0)),
            pl.BlockSpec((1, n_words_pad, WD), lambda b, l, fw: (b, 0, 0)),
        ],
        scratch_shapes=[pltpu.VMEM((T, D), jnp.float32)],
    )

    enc_out_pad, q_pad = pl.pallas_call(
        _encoder_kernel,
        out_shape=(
            jax.ShapeDtypeStruct((B, n_words_pad, D), jnp.float32),
            jax.ShapeDtypeStruct((B, n_words_pad, WD), jnp.float32),
        ),
        grid_spec=grid_spec,
        compiler_params=pltpu.CompilerParams(
            dimension_semantics=("parallel", "arbitrary"),
            vmem_limit_bytes=64 * 1024 * 1024,
        ),
    )(
        frameworks.astype(jnp.int32),                   # scalar-prefetch operand
        ts,
        gamma_l,
        beta_l,
        hidden_states,                                  # bf16 (or f32), no host cast
        params["qg_weight"].astype(jnp.float32),
        params["qg_bias"].reshape(n_fw, 1, WD).astype(jnp.float32),
    )

    enc_out = enc_out_pad[:, :n_words, :]
    q = q_pad[:, :n_words, :]
    # queries.view(B, S, WF, D).flatten(1, 2): row-major reshape (layout-free).
    decoder_input = q.reshape(B, n_words, width_factor, D).reshape(
        B, n_words * width_factor, D)
    return enc_out, decoder_input


# ----------------------------------------------------------------------------
# Pure-JAX reference for a correctness check.
# ----------------------------------------------------------------------------
def reference_forward(params, hidden_states, to_scatter, n_words, frameworks,
                      width_factor):
    L, B, T, D = hidden_states.shape
    mean = hidden_states.mean(-1, keepdims=True)
    var = ((hidden_states - mean) ** 2).mean(-1, keepdims=True)
    enc = (hidden_states - mean) / jnp.sqrt(var + LN_EPS)
    enc = enc * params["ln_gamma"] + params["ln_beta"]
    w = jax.nn.softmax(params["scores"].reshape(L, 1, 1, 1), axis=0)
    enc = (w * enc).sum(0)
    src = enc[:, 1:-1, :]
    out = jnp.zeros((B, n_words + 1, D), jnp.float32)
    out = out.at[jnp.arange(B)[:, None], to_scatter, :].add(src)
    out = out[:, :-1, :]
    W = params["qg_weight"][frameworks]
    bvec = params["qg_bias"][frameworks][:, None, :]
    q = jnp.tanh(jnp.einsum("bsd,bde->bse", out, W) + bvec)
    S = out.shape[1]
    q = q.reshape(B, S, width_factor, D).reshape(B, S * width_factor, D)
    return out, q


if __name__ == "__main__":
    # Small config: hidden_size=128 (lane-dense), n_encoder_layers=3,
    # query_length=2, 2 frameworks, batch=2, bert seq len=10 (incl. [CLS]/[SEP]),
    # n_words=6 (padded to 8 inside the kernel).
    D, L, WF, N_FW = 128, 3, 2, 2
    B, T = 2, 10
    n_words = 6
    S_in = T - 2
    WD = WF * D

    key = jax.random.PRNGKey(0)
    k_hs, k_ts, k_fw, k_w, k_s, k_b, k_g, k_be = jax.random.split(key, 8)

    hidden_f32 = jax.random.normal(k_hs, (L, B, T, D), jnp.float32)
    # bf16 in HBM, as a bf16 BERT backbone would hand over; the kernel upcasts.
    hidden_states = hidden_f32.astype(jnp.bfloat16)
    to_scatter = jax.random.randint(k_ts, (B, S_in), 0, n_words + 1, jnp.int32)
    frameworks = jax.random.randint(k_fw, (B,), 0, N_FW, jnp.int32)

    # Parameter init. NOTE: the module init repeats one kaiming matrix across
    # frameworks; the test uses distinct per-framework weights so the
    # framework-selection path is actually exercised (semantics are
    # init-independent). Gamma/beta are perturbed off 1/0 for the same reason.
    bound = 1.0 / jnp.sqrt(jnp.float32(D))
    qg_weight = jax.random.uniform(k_w, (N_FW, D, WD), jnp.float32, -bound, bound)
    params = {
        "scores": 0.1 * jax.random.normal(k_s, (L, 1, 1, 1), jnp.float32),
        "ln_gamma": 1.0 + 0.1 * jax.random.normal(k_g, (D,), jnp.float32),
        "ln_beta": 0.1 * jax.random.normal(k_be, (D,), jnp.float32),
        "qg_weight": qg_weight,
        "qg_bias": 0.1 * jax.random.normal(k_b, (N_FW, WD), jnp.float32),
    }

    fwd = functools.partial(encoder_forward, width_factor=WF)
    enc_out, dec_in = fwd(params, hidden_states, to_scatter, n_words, frameworks)
    jax.block_until_ready((enc_out, dec_in))

    # Reference sees the same bf16-rounded hidden states (upcast to f32).
    ref_out, ref_dec = reference_forward(params, hidden_states.astype(jnp.float32),
                                         to_scatter, n_words, frameworks, WF)
    assert enc_out.shape == (B, n_words, D)
    assert dec_in.shape == (B, n_words * WF, D)
    assert jnp.allclose(enc_out, ref_out, atol=2e-4, rtol=2e-4)
    assert jnp.allclose(dec_in, ref_dec, atol=2e-4, rtol=2e-4)

    print("KERNEL_OK")
</pallas_src>

<mosaic_0001>
module attributes {stable_mosaic.version = 11 : i64} {
  func.func @_encoder_kernel(%arg0: i32, %arg1: i32, %arg2: memref<2xi32, #tpu.memory_space<smem>>, %arg3: memref<1x1x10xi32, #tpu.memory_space<vmem>>, %arg4: memref<1x1x128xf32, #tpu.memory_space<vmem>>, %arg5: memref<1x1x128xf32, #tpu.memory_space<vmem>>, %arg6: memref<1x1x10x128xbf16, #tpu.memory_space<vmem>>, %arg7: memref<1x128x256xf32, #tpu.memory_space<vmem>>, %arg8: memref<1x1x256xf32, #tpu.memory_space<vmem>>, %arg9: memref<1x8x128xf32, #tpu.memory_space<vmem>>, %arg10: memref<1x8x256xf32, #tpu.memory_space<vmem>>, %arg11: memref<10x128xf32, #tpu.memory_space<vmem>>) attributes {dimension_semantics = [#tpu.dimension_semantics<parallel>, #tpu.dimension_semantics<arbitrary>], iteration_bounds = array<i64: 2, 3>, scalar_prefetch = 1 : i64, scratch_operands = 1 : i64, tpu.core_type = #tpu.core_type<tc>, window_params = [{transform_indices = @transform_0, window_bounds = array<i64: 1, 1, 10>}, {transform_indices = @transform_1, window_bounds = array<i64: 1, 1, 128>}, {transform_indices = @transform_2, window_bounds = array<i64: 1, 1, 128>}, {transform_indices = @transform_3, window_bounds = array<i64: 1, 1, 10, 128>}, {transform_indices = @transform_4, window_bounds = array<i64: 1, 128, 256>}, {transform_indices = @transform_5, window_bounds = array<i64: 1, 1, 256>}, {transform_indices = @transform_6, window_bounds = array<i64: 1, 8, 128>}, {transform_indices = @transform_7, window_bounds = array<i64: 1, 8, 256>}]} {
    %c0 = arith.constant 0 : index
    %c0_0 = arith.constant 0 : index
    %c0_1 = arith.constant 0 : index
    %c0_2 = arith.constant 0 : index
    %0 = vector.load %arg6[%c0, %c0_0, %c0_1, %c0_2] : memref<1x1x10x128xbf16, #tpu.memory_space<vmem>>, vector<1x1x10x128xbf16>
    %1 = vector.shape_cast %0 : vector<1x1x10x128xbf16> to vector<10x128xbf16>
    %2 = arith.extf %1 : vector<10x128xbf16> to vector<10x128xf32>
    %cst = arith.constant dense<0.000000e+00> : vector<10xf32>
    %3 = vector.multi_reduction <add>, %2, %cst [1] : vector<10x128xf32> to vector<10xf32>
    %4 = vector.shape_cast %3 : vector<10xf32> to vector<10x1xf32>
    %cst_3 = arith.constant 7.812500e-03 : f32
    %5 = vector.broadcast %cst_3 : f32 to vector<10x1xf32>
    %6 = arith.mulf %4, %5 : vector<10x1xf32>
    %7 = vector.broadcast %6 : vector<10x1xf32> to vector<10x128xf32>
    %8 = arith.subf %2, %7 : vector<10x128xf32>
    %9 = arith.mulf %8, %8 : vector<10x128xf32>
    %cst_4 = arith.constant dense<0.000000e+00> : vector<10xf32>
    %10 = vector.multi_reduction <add>, %9, %cst_4 [1] : vector<10x128xf32> to vector<10xf32>
    %11 = vector.shape_cast %10 : vector<10xf32> to vector<10x1xf32>
    %cst_5 = arith.constant 7.812500e-03 : f32
    %12 = vector.broadcast %cst_5 : f32 to vector<10x1xf32>
    %13 = arith.mulf %11, %12 : vector<10x1xf32>
    %cst_6 = arith.constant 9.99999974E-6 : f32
    %14 = vector.broadcast %cst_6 : f32 to vector<10x1xf32>
    %15 = arith.addf %13, %14 : vector<10x1xf32>
    %16 = math.rsqrt %15 : vector<10x1xf32>
    %17 = vector.broadcast %16 : vector<10x1xf32> to vector<10x128xf32>
    %18 = arith.mulf %8, %17 : vector<10x128xf32>
    %c0_7 = arith.constant 0 : index
    %c0_8 = arith.constant 0 : index
    %c0_9 = arith.constant 0 : index
    %19 = vector.load %arg4[%c0_7, %c0_8, %c0_9] : memref<1x1x128xf32, #tpu.memory_space<vmem>>, vector<1x1x128xf32>
    %20 = vector.shape_cast %19 : vector<1x1x128xf32> to vector<1x128xf32>
    %21 = vector.broadcast %20 : vector<1x128xf32> to vector<10x128xf32>
    %22 = arith.mulf %18, %21 : vector<10x128xf32>
    %c0_10 = arith.constant 0 : index
    %c0_11 = arith.constant 0 : index
    %c0_12 = arith.constant 0 : index
    %23 = vector.load %arg5[%c0_10, %c0_11, %c0_12] : memref<1x1x128xf32, #tpu.memory_space<vmem>>, vector<1x1x128xf32>
    %24 = vector.shape_cast %23 : vector<1x1x128xf32> to vector<1x128xf32>
    %25 = vector.broadcast %24 : vector<1x128xf32> to vector<10x128xf32>
    %26 = arith.addf %22, %25 : vector<10x128xf32>
    %c0_i32 = arith.constant 0 : i32
    %27 = arith.cmpi eq, %arg1, %c0_i32 : i32
    %28 = arith.extui %27 : i1 to i32
    %c0_i32_13 = arith.constant 0 : i32
    %29 = arith.cmpi ne, %28, %c0_i32_13 : i32
    scf.if %29 {
      %c0_17 = arith.constant 0 : index
      %c0_18 = arith.constant 0 : index
      %36 = vector.load %arg11[%c0_17, %c0_18] : memref<10x128xf32, #tpu.memory_space<vmem>>, vector<10x128xf32>
      tpu.vector_store %arg11[%c0_17, %c0_18], %26 {strides = array<i32>} : memref<10x128xf32, #tpu.memory_space<vmem>>, vector<10x128xf32>,
    } else {
    }
    %c0_i32_14 = arith.constant 0 : i32
    %30 = arith.cmpi sgt, %arg1, %c0_i32_14 : i32
    %31 = arith.extui %30 : i1 to i32
    %c0_i32_15 = arith.constant 0 : i32
    %32 = arith.cmpi ne, %31, %c0_i32_15 : i32
    scf.if %32 {
      %c0_17 = arith.constant 0 : index
      %c0_18 = arith.constant 0 : index
      %36 = vector.load %arg11[%c0_17, %c0_18] : memref<10x128xf32, #tpu.memory_space<vmem>>, vector<10x128xf32>
      %37 = arith.addf %36, %26 : vector<10x128xf32>
      %c0_19 = arith.constant 0 : index
      %c0_20 = arith.constant 0 : index
      %38 = vector.load %arg11[%c0_19, %c0_20] : memref<10x128xf32, #tpu.memory_space<vmem>>, vector<10x128xf32>
      tpu.vector_store %arg11[%c0_19, %c0_20], %37 {strides = array<i32>} : memref<10x128xf32, #tpu.memory_space<vmem>>, vector<10x128xf32>,
    } else {
    }
    %c2_i32 = arith.constant 2 : i32
    %33 = arith.cmpi eq, %arg1, %c2_i32 : i32
    %34 = arith.extui %33 : i1 to i32
    %c0_i32_16 = arith.constant 0 : i32
    %35 = arith.cmpi ne, %34, %c0_i32_16 : i32
    scf.if %35 {
      %c0_17 = arith.constant 0 : index
      %c0_18 = arith.constant 0 : index
      %36 = vector.load %arg11[%c0_17, %c0_18] : memref<10x128xf32, #tpu.memory_space<vmem>>, vector<10x128xf32>
      %c0_19 = arith.constant 0 : index
      %c0_20 = arith.constant 0 : index
      %c0_21 = arith.constant 0 : index
      %37 = vector.load %arg3[%c0_19, %c0_20, %c0_21] : memref<1x1x10xi32, #tpu.memory_space<vmem>>, vector<1x1x10xi32>
      %38 = vector.shape_cast %37 : vector<1x1x10xi32> to vector<1x10xi32>
      %39 = tpu.iota {dimensions = array<i32: 0>} : vector<8x10xi32>
      %40 = vector.broadcast %38 : vector<1x10xi32> to vector<8x10xi32>
      %41 = arith.cmpi eq, %39, %40 : vector<8x10xi32>
      %42 = arith.extui %41 : vector<8x10xi1> to vector<8x10xi32>
      %43 = arith.sitofp %42 : vector<8x10xi32> to vector<8x10xf32>
      %cst_22 = arith.constant dense<0.000000e+00> : vector<8x128xf32>
      %44 = tpu.matmul %43, %36, %cst_22 {dimension_numbers = #tpu.dot_dimension_numbers<[1], [0], [0], [1], [0, 0, 1, 1], [], []>} : vector<8x10xf32>, vector<10x128xf32>, vector<8x128xf32> -> vector<8x128xf32>
      %c0_23 = arith.constant 0 : index
      %c0_24 = arith.constant 0 : index
      %c0_25 = arith.constant 0 : index
      %45 = vector.load %arg9[%c0_23, %c0_24, %c0_25] : memref<1x8x128xf32, #tpu.memory_space<vmem>>, vector<1x8x128xf32>
      %46 = vector.shape_cast %45 : vector<1x8x128xf32> to vector<8x128xf32>
      %47 = vector.shape_cast %44 : vector<8x128xf32> to vector<1x8x128xf32>
      tpu.vector_store %arg9[%c0_23, %c0_24, %c0_25], %47 {strides = array<i32>} : memref<1x8x128xf32, #tpu.memory_space<vmem>>, vector<1x8x128xf32>,
      %c0_26 = arith.constant 0 : index
      %c0_27 = arith.constant 0 : index
      %c0_28 = arith.constant 0 : index
      %48 = vector.load %arg7[%c0_26, %c0_27, %c0_28] : memref<1x128x256xf32, #tpu.memory_space<vmem>>, vector<1x128x256xf32>
      %49 = vector.shape_cast %48 : vector<1x128x256xf32> to vector<128x256xf32>
      %c0_29 = arith.constant 0 : index
      %c0_30 = arith.constant 0 : index
      %c0_31 = arith.constant 0 : index
      %50 = vector.load %arg8[%c0_29, %c0_30, %c0_31] : memref<1x1x256xf32, #tpu.memory_space<vmem>>, vector<1x1x256xf32>
      %51 = vector.shape_cast %50 : vector<1x1x256xf32> to vector<1x256xf32>
      %cst_32 = arith.constant dense<0.000000e+00> : vector<8x256xf32>
      %52 = tpu.matmul %44, %49, %cst_32 {dimension_numbers = #tpu.dot_dimension_numbers<[1], [0], [0], [1], [0, 0, 1, 1], [], []>} : vector<8x128xf32>, vector<128x256xf32>, vector<8x256xf32> -> vector<8x256xf32>
      %53 = vector.broadcast %51 : vector<1x256xf32> to vector<8x256xf32>
      %54 = arith.addf %52, %53 : vector<8x256xf32>
      %55 = math.tanh %54 : vector<8x256xf32>
      %c0_33 = arith.constant 0 : index
      %c0_34 = arith.constant 0 : index
      %c0_35 = arith.constant 0 : index
      %56 = vector.load %arg10[%c0_33, %c0_34, %c0_35] : memref<1x8x256xf32, #tpu.memory_space<vmem>>, vector<1x8x256xf32>
      %57 = vector.shape_cast %56 : vector<1x8x256xf32> to vector<8x256xf32>
      %58 = vector.shape_cast %55 : vector<8x256xf32> to vector<1x8x256xf32>
      tpu.vector_store %arg10[%c0_33, %c0_34, %c0_35], %58 {strides = array<i32>} : memref<1x8x256xf32, #tpu.memory_space<vmem>>, vector<1x8x256xf32>,
    } else {
    }
    return
  }
  func.func @transform_0(%arg0: i32, %arg1: i32, %arg2: memref<2xi32, #tpu.memory_space<smem>>) -> (i32, i32, i32) {
    %c0_i32 = arith.constant 0 : i32
    %c0_i32_0 = arith.constant 0 : i32
    %c0_i32_1 = arith.constant 0 : i32
    return %arg0, %c0_i32, %c0_i32_0 : i32, i32, i32
  }
  func.func @transform_1(%arg0: i32, %arg1: i32, %arg2: memref<2xi32, #tpu.memory_space<smem>>) -> (i32, i32, i32) {
    %c0_i32 = arith.constant 0 : i32
    %c0_i32_0 = arith.constant 0 : i32
    %c0_i32_1 = arith.constant 0 : i32
    return %arg1, %c0_i32, %c0_i32_0 : i32, i32, i32
  }
  func.func @transform_2(%arg0: i32, %arg1: i32, %arg2: memref<2xi32, #tpu.memory_space<smem>>) -> (i32, i32, i32) {
    %c0_i32 = arith.constant 0 : i32
    %c0_i32_0 = arith.constant 0 : i32
    %c0_i32_1 = arith.constant 0 : i32
    return %arg1, %c0_i32, %c0_i32_0 : i32, i32, i32
  }
  func.func @transform_3(%arg0: i32, %arg1: i32, %arg2: memref<2xi32, #tpu.memory_space<smem>>) -> (i32, i32, i32, i32) {
    %c0_i32 = arith.constant 0 : i32
    %c0_i32_0 = arith.constant 0 : i32
    %c0_i32_1 = arith.constant 0 : i32
    return %arg1, %arg0, %c0_i32, %c0_i32_0 : i32, i32, i32, i32
  }
  func.func @transform_4(%arg0: i32, %arg1: i32, %arg2: memref<2xi32, #tpu.memory_space<smem>>) -> (i32, i32, i32) {
    %0 = arith.index_cast %arg0 : i32 to index
    %1 = memref.load %arg2[%0] : memref<2xi32, #tpu.memory_space<smem>>
    %c0_i32 = arith.constant 0 : i32
    %c0_i32_0 = arith.constant 0 : i32
    %c0_i32_1 = arith.constant 0 : i32
    return %1, %c0_i32, %c0_i32_0 : i32, i32, i32
  }
  func.func @transform_5(%arg0: i32, %arg1: i32, %arg2: memref<2xi32, #tpu.memory_space<smem>>) -> (i32, i32, i32) {
    %0 = arith.index_cast %arg0 : i32 to index
    %1 = memref.load %arg2[%0] : memref<2xi32, #tpu.memory_space<smem>>
    %c0_i32 = arith.constant 0 : i32
    %c0_i32_0 = arith.constant 0 : i32
    %c0_i32_1 = arith.constant 0 : i32
    return %1, %c0_i32, %c0_i32_0 : i32, i32, i32
  }
  func.func @transform_6(%arg0: i32, %arg1: i32, %arg2: memref<2xi32, #tpu.memory_space<smem>>) -> (i32, i32, i32) {
    %c0_i32 = arith.constant 0 : i32
    %c0_i32_0 = arith.constant 0 : i32
    %c0_i32_1 = arith.constant 0 : i32
    return %arg0, %c0_i32, %c0_i32_0 : i32, i32, i32
  }
  func.func @transform_7(%arg0: i32, %arg1: i32, %arg2: memref<2xi32, #tpu.memory_space<smem>>) -> (i32, i32, i32) {
    %c0_i32 = arith.constant 0 : i32
    %c0_i32_0 = arith.constant 0 : i32
    %c0_i32_1 = arith.constant 0 : i32
    return %arg0, %c0_i32, %c0_i32_0 : i32, i32, i32
  }
}

</mosaic_0001>

<llo_original>
// kernel: tpu_custom_call.1
$region0: #{tpu_custom_call.1}
  #allocation0 [shape = 'u32[]', space=smem, size = 0x4, offset = 0x4, fixed_abs, tag = 'smem constant byte address 0x4 - core index']
  #allocation1 [shape = 'u32[72,128]{1,0:T(1,128)}', space=vmem, size = 0x9000, scoped, tag = 'internal scratch']
  #allocation2 [shape = 'f32[10,128]{1,0:T(8,128)}', space=vmem, size = 0x2000, scoped, tag = 'scratch operand']
  #allocation3 [shape = 's32[1]{0}', space=sflag, size = 0x4, scoped, tag = 'scoped memory for tpu_custom_call.1']
  #allocation4 [shape = 'u8[512]{0}', space=smem, size = 0x200, scoped, tag = 'prefetched SMEM operand 0']
  %s0 = inlined_call_operand.vmem [shape: s32[2], index: 0, kind: input, shape index: {}]
  %s1 = inlined_call_operand.vmem [shape: s32[2,1,10], index: 1, kind: input, shape index: {}]
  %s2 = inlined_call_operand.vmem [shape: f32[3,1,128], index: 2, kind: input, shape index: {}]
  %s3 = inlined_call_operand.vmem [shape: f32[3,1,128], index: 3, kind: input, shape index: {}]
  %s4 = inlined_call_operand.vmem [shape: bf16[3,2,10,128], index: 4, kind: input, shape index: {}]
  %s5 = inlined_call_operand.hbm [shape: f32[2,128,256], index: 5, kind: input, shape index: {}]
  %s6 = inlined_call_operand.vmem [shape: f32[2,1,256], index: 6, kind: input, shape index: {}]
  %s7 = inlined_call_operand.hbm [shape: f32[2,8,128], index: 7, kind: output, shape index: {0}]
  %s8 = inlined_call_operand.hbm [shape: f32[2,8,256], index: 8, kind: output, shape index: {1}]
  %9 = xla_tuple %s7, %s8
  %s10 = sld [smem:[#allocation0]]
  $region81: #{tpu_custom_call.1} parent=0
    _
  %s12 = ssub.s32 1, %s10
  %s13 = scalar_select 0, %s12, %s10
  %s15 = sshll.u32 %s0, 4
  %s16 = int_to_ptr.vmem [resolvable:$true] %s15
  %18 = dma.vmem_to_smem %s16, 16, [#allocation4], [#allocation3]
  %20 = dma.done [#allocation3], 16
  %21 = sfence
  $region1: #{tpu_custom_call.1} parent=0
    #allocation5 [shape = 'u8[262144]{0}', space=vmem, size = 0x40000, scoped, tag = 'input window, operand 5']
    #allocation6 [shape = 's32[2]{0}', space=sflag, size = 0x8, scoped, tag = 'scoped memory for tpu_custom_call.1']
    #allocation7 [shape = 's32[2]{0}', space=sflag, size = 0x8, scoped, tag = 'scoped memory for tpu_custom_call.1']
    #allocation8 [shape = 'u8[8192]{0}', space=vmem, size = 0x2000, scoped, tag = 'output window, operand 0']
    #allocation9 [shape = 'u8[16384]{0}', space=vmem, size = 0x4000, scoped, tag = 'output window, operand 1']
    #allocation10 [shape = 's32[2]{0}', space=sflag, size = 0x8, scoped, tag = 'scoped memory for tpu_custom_call.1']
    %22 = vsyncpa [#allocation6], 0
    %s23 = scalar_lea.sflag [#allocation6], 1
    %24 = vsyncpa %s23, 0
    %25 = vsyncpa [#allocation7], 0
    %s26 = scalar_lea.sflag [#allocation7], 1
    %27 = vsyncpa %s26, 0
    %28 = vsyncpa [#allocation10], 0
    %s29 = scalar_lea.sflag [#allocation10], 1
    %30 = vsyncpa %s29, 0
    loop: start=0, step=1, limit=8
    $region2: #{tpu_custom_call.1} parent=1 // loop_pre_header
      _
    $region3: #{tpu_custom_call.1} parent=1 // loop_header
      %s32 = sphi 0, %s36
      %p33 = scmp.ge.s32.totalorder %s32, 8
      %s39 = sphi 0, %s51
      %s40 = sphi 0, %s47
      %s41 = sphi 0, %s39
      %s42 = sphi 0, %s40
      %s43 = sphi 0, %s41
      %s44 = sphi 0, %s42
      %s54 = sphi 0, %s56
      %s57 = sphi 0, %s54
      %s58 = sphi 0, %s57
      %s74 = sphi 0, %s58
      %s80 = sphi 0, %s82
      %s83 = sphi 0, %s80
      %s84 = sphi 0, %s83
      %s100 = sphi 0, %s84
      %s106 = sphi 0, %s108
      %s109 = sphi 0, %s106
      %s110 = sphi 0, %s109
      %s126 = sphi 0, %s110
      %s134 = sphi 0, %s136
      %s137 = sphi 0, %s134
      %s138 = sphi 0, %s137
      %s154 = sphi 0, %s138
      %s162 = sphi 0, %s164
      %s165 = sphi 0, %s162
      %s166 = sphi 0, %s165
      %s182 = sphi 0, %s166
      %s190 = sphi 0, %s192
      %s193 = sphi 0, %s190
      %s194 = sphi 0, %s193
      %s210 = sphi 0, %s194
      %s216 = sphi 0, %s218
      %s219 = sphi 0, %s216
      %s220 = sphi 0, %s219
      %s236 = sphi 0, %s220
      %s242 = sphi 0, %s244
      %s245 = sphi 0, %s242
      %s246 = sphi 0, %s245
      %s262 = sphi 0, %s246
    $region4: #{tpu_custom_call.1} parent=1 // loop_header_branch
      %35 = sbr.rel (%p33) target = $region8
    $region5: #{tpu_custom_call.1} parent=1 // loop_body
      %s37 = ssub.s32 %s32, 1
      %s38 = ssub.s32 %s32, 2
      %s45 = sadd.s32 1, %s40
      %p46 = scmp.ge.s32.totalorder %s45, 3
      %s47 = scalar_select %p46, 0, %s45
      %s48 = sadd.s32 1, %s39
      %s49 = scalar_select %p46, %s48, %s39
      %p50 = scmp.ge.s32.totalorder %s49, 2
      %s51 = scalar_select %p50, 0, %s49
      %s52 = ssub.s32 %s39, %s51
      %p53 = scmp.eq.s32.totalorder %s52, 0
      %s55 = sadd.s32 %s54, 1
      %s56 = scalar_select %p53, %s54, %s55
      %p59 = pneg %p53
      %p60 = scmp.eq.s32.totalorder %s32, 5
      %p61 = por %p59, %p60
      %p62 = scmp.ne.s32.totalorder %s54, %s57
      %p63 = scmp.eq.s32.totalorder %s32, 0
      %p64 = por %p62, %p63
      %p65 = scmp.ne.s32.totalorder %s54, %s57
      %p66 = scmp.eq.s32.totalorder %s37, 5
      %p67 = por %p65, %p66
      %p68 = scmp.ne.s32.totalorder %s57, %s58
      %p69 = scmp.eq.s32.totalorder %s37, 0
      %p70 = por %p68, %p69
      %p71 = scmp.ne.s32.totalorder %s57, %s58
      %p72 = scmp.eq.s32.totalorder %s38, 5
      %p73 = por %p71, %p72
      %p75 = scmp.ne.s32.totalorder %s58, %s74
      %p76 = scmp.eq.s32.totalorder %s38, 0
      %p77 = por %p75, %p76
      %s78 = ssub.s32 %s40, %s47
      %p79 = scmp.eq.s32.totalorder %s78, 0
      %s81 = sadd.s32 %s80, 1
      %s82 = scalar_select %p79, %s80, %s81
      %p85 = pneg %p79
      %p86 = scmp.eq.s32.totalorder %s32, 5
      %p87 = por %p85, %p86
      %p88 = scmp.ne.s32.totalorder %s80, %s83
      %p89 = scmp.eq.s32.totalorder %s32, 0
      %p90 = por %p88, %p89
      %p91 = scmp.ne.s32.totalorder %s80, %s83
      %p92 = scmp.eq.s32.totalorder %s37, 5
      %p93 = por %p91, %p92
      %p94 = scmp.ne.s32.totalorder %s83, %s84
      %p95 = scmp.eq.s32.totalorder %s37, 0
      %p96 = por %p94, %p95
      %p97 = scmp.ne.s32.totalorder %s83, %s84
      %p98 = scmp.eq.s32.totalorder %s38, 5
      %p99 = por %p97, %p98
      %p101 = scmp.ne.s32.totalorder %s84, %s100
      %p102 = scmp.eq.s32.totalorder %s38, 0
      %p103 = por %p101, %p102
      %s104 = ssub.s32 %s40, %s47
      %p105 = scmp.eq.s32.totalorder %s104, 0
      %s107 = sadd.s32 %s106, 1
      %s108 = scalar_select %p105, %s106, %s107
      %p111 = pneg %p105
      %p112 = scmp.eq.s32.totalorder %s32, 5
      %p113 = por %p111, %p112
      %p114 = scmp.ne.s32.totalorder %s106, %s109
      %p115 = scmp.eq.s32.totalorder %s32, 0
      %p116 = por %p114, %p115
      %p117 = scmp.ne.s32.totalorder %s106, %s109
      %p118 = scmp.eq.s32.totalorder %s37, 5
      %p119 = por %p117, %p118
      %p120 = scmp.ne.s32.totalorder %s109, %s110
      %p121 = scmp.eq.s32.totalorder %s37, 0
      %p122 = por %p120, %p121
      %p123 = scmp.ne.s32.totalorder %s109, %s110
      %p124 = scmp.eq.s32.totalorder %s38, 5
      %p125 = por %p123, %p124
      %p127 = scmp.ne.s32.totalorder %s110, %s126
      %p128 = scmp.eq.s32.totalorder %s38, 0
      %p129 = por %p127, %p128
      %s130 = ssub.s32 %s40, %s47
      %s131 = ssub.s32 %s39, %s51
      %s132 = sor.u32 %s130, %s131
      %p133 = scmp.eq.s32.totalorder %s132, 0
      %s135 = sadd.s32 %s134, 1
      %s136 = scalar_select %p133, %s134, %s135
      %p139 = pneg %p133
      %p140 = scmp.eq.s32.totalorder %s32, 5
      %p141 = por %p139, %p140
      %p142 = scmp.ne.s32.totalorder %s134, %s137
      %p143 = scmp.eq.s32.totalorder %s32, 0
      %p144 = por %p142, %p143
      %p145 = scmp.ne.s32.totalorder %s134, %s137
      %p146 = scmp.eq.s32.totalorder %s37, 5
      %p147 = por %p145, %p146
      %p148 = scmp.ne.s32.totalorder %s137, %s138
      %p149 = scmp.eq.s32.totalorder %s37, 0
      %p150 = por %p148, %p149
      %p151 = scmp.ne.s32.totalorder %s137, %s138
      %p152 = scmp.eq.s32.totalorder %s38, 5
      %p153 = por %p151, %p152
      %p155 = scmp.ne.s32.totalorder %s138, %s154
      %p156 = scmp.eq.s32.totalorder %s38, 0
      %p157 = por %p155, %p156
      %s158 = sld [smem:[#allocation4 + %s39]]
      %s159 = sld [smem:[#allocation4 + %s51]]
      %s160 = ssub.s32 %s158, %s159
      %p161 = scmp.eq.s32.totalorder %s160, 0
      %s163 = sadd.s32 %s162, 1
      %s164 = scalar_select %p161, %s162, %s163
      %p167 = pneg %p161
      %p168 = scmp.eq.s32.totalorder %s32, 5
      %p169 = por %p167, %p168
      %p170 = scmp.ne.s32.totalorder %s162, %s165
      %p171 = scmp.eq.s32.totalorder %s32, 0
      %p172 = por %p170, %p171
      %p173 = scmp.ne.s32.totalorder %s162, %s165
      %p174 = scmp.eq.s32.totalorder %s37, 5
      %p175 = por %p173, %p174
      %p176 = scmp.ne.s32.totalorder %s165, %s166
      %p177 = scmp.eq.s32.totalorder %s37, 0
      %p178 = por %p176, %p177
      %p179 = scmp.ne.s32.totalorder %s165, %s166
      %p180 = scmp.eq.s32.totalorder %s38, 5
      %p181 = por %p179, %p180
      %p183 = scmp.ne.s32.totalorder %s166, %s182
      %p184 = scmp.eq.s32.totalorder %s38, 0
      %p185 = por %p183, %p184
      %s186 = sld [smem:[#allocation4 + %s39]]
      %s187 = sld [smem:[#allocation4 + %s51]]
      %s188 = ssub.s32 %s186, %s187
      %p189 = scmp.eq.s32.totalorder %s188, 0
      %s191 = sadd.s32 %s190, 1
      %s192 = scalar_select %p189, %s190, %s191
      %p195 = pneg %p189
      %p196 = scmp.eq.s32.totalorder %s32, 5
      %p197 = por %p195, %p196
      %p198 = scmp.ne.s32.totalorder %s190, %s193
      %p199 = scmp.eq.s32.totalorder %s32, 0
      %p200 = por %p198, %p199
      %p201 = scmp.ne.s32.totalorder %s190, %s193
      %p202 = scmp.eq.s32.totalorder %s37, 5
      %p203 = por %p201, %p202
      %p204 = scmp.ne.s32.totalorder %s193, %s194
      %p205 = scmp.eq.s32.totalorder %s37, 0
      %p206 = por %p204, %p205
      %p207 = scmp.ne.s32.totalorder %s193, %s194
      %p208 = scmp.eq.s32.totalorder %s38, 5
      %p209 = por %p207, %p208
      %p211 = scmp.ne.s32.totalorder %s194, %s210
      %p212 = scmp.eq.s32.totalorder %s38, 0
      %p213 = por %p211, %p212
      %s214 = ssub.s32 %s39, %s51
      %p215 = scmp.eq.s32.totalorder %s214, 0
      %s217 = sadd.s32 %s216, 1
      %s218 = scalar_select %p215, %s216, %s217
      %p221 = pneg %p215
      %p222 = scmp.eq.s32.totalorder %s32, 5
      %p223 = por %p221, %p222
      %p224 = scmp.ne.s32.totalorder %s216, %s219
      %p225 = scmp.eq.s32.totalorder %s32, 0
      %p226 = por %p224, %p225
      %p227 = scmp.ne.s32.totalorder %s216, %s219
      %p228 = scmp.eq.s32.totalorder %s37, 5
      %p229 = por %p227, %p228
      %p230 = scmp.ne.s32.totalorder %s219, %s220
      %p231 = scmp.eq.s32.totalorder %s37, 0
      %p232 = por %p230, %p231
      %p233 = scmp.ne.s32.totalorder %s219, %s220
      %p234 = scmp.eq.s32.totalorder %s38, 5
      %p235 = por %p233, %p234
      %p237 = scmp.ne.s32.totalorder %s220, %s236
      %p238 = scmp.eq.s32.totalorder %s38, 0
      %p239 = por %p237, %p238
      %s240 = ssub.s32 %s39, %s51
      %p241 = scmp.eq.s32.totalorder %s240, 0
      %s243 = sadd.s32 %s242, 1
      %s244 = scalar_select %p241, %s242, %s243
      %p247 = pneg %p241
      %p248 = scmp.eq.s32.totalorder %s32, 5
      %p249 = por %p247, %p248
      %p250 = scmp.ne.s32.totalorder %s242, %s245
      %p251 = scmp.eq.s32.totalorder %s32, 0
      %p252 = por %p250, %p251
      %p253 = scmp.ne.s32.totalorder %s242, %s245
      %p254 = scmp.eq.s32.totalorder %s37, 5
      %p255 = por %p253, %p254
      %p256 = scmp.ne.s32.totalorder %s245, %s246
      %p257 = scmp.eq.s32.totalorder %s37, 0
      %p258 = por %p256, %p257
      %p259 = scmp.ne.s32.totalorder %s245, %s246
      %p260 = scmp.eq.s32.totalorder %s38, 5
      %p261 = por %p259, %p260
      %p263 = scmp.ne.s32.totalorder %s246, %s262
      %p264 = scmp.eq.s32.totalorder %s38, 0
      %p265 = por %p263, %p264
      %p266 = scmp.le.s32.totalorder 1, %s32
      %p267 = scmp.lt.s32.totalorder %s32, 7
      %p268 = pnand %p266, %p267
      %p269 = pneg %p268
      // Predicated region
      $region9: #{tpu_custom_call.1} parent=5 // pred_check
        _
      $region10: #{tpu_custom_call.1} parent=5 // pred_check_branch
        %271 = sbr.rel (%p268) target = $region12
      $region11: #{tpu_custom_call.1} parent=5 // pred_region
        %s272 = ssub.s32 %s32, 1
      $region12: #{tpu_custom_call.1} parent=5 // pred_fallthru
        _
      %p273 = scmp.lt.s32.totalorder %s32, 6
      // Predicated region
      $region13: #{tpu_custom_call.1} parent=5 // pred_check
        %p274 = pneg %p273
      $region14: #{tpu_custom_call.1} parent=5 // pred_check_branch
        %276 = sbr.rel (%p274) target = $region16
      $region15: #{tpu_custom_call.1} parent=5 // pred_region
        // Predicated region
        $region17: #{tpu_custom_call.1} parent=15 // pred_check
          %p277 = pneg %p64
        $region18: #{tpu_custom_call.1} parent=15 // pred_check_branch
          %279 = sbr.rel (%p277) target = $region20
        $region19: #{tpu_custom_call.1} parent=15 // pred_region
          %p280 = scmp.lt.s32.totalorder %s39, 1
          %s281 = scalar_select %p280, %s39, 1
          %s282 = scalar_lea.vmem %s1, %s281
        $region20: #{tpu_custom_call.1} parent=15 // pred_fallthru
          _
        // Predicated region
        $region21: #{tpu_custom_call.1} parent=15 // pred_check
          %p283 = pneg %p90
        $region22: #{tpu_custom_call.1} parent=15 // pred_check_branch
          %285 = sbr.rel (%p283) target = $region24
        $region23: #{tpu_custom_call.1} parent=15 // pred_region
          %p286 = scmp.lt.s32.totalorder %s40, 2
          %s287 = scalar_select %p286, %s40, 2
          %s288 = scalar_lea.vmem %s2, %s287
        $region24: #{tpu_custom_call.1} parent=15 // pred_fallthru
          _
        // Predicated region
        $region25: #{tpu_custom_call.1} parent=15 // pred_check
          %p289 = pneg %p116
        $region26: #{tpu_custom_call.1} parent=15 // pred_check_branch
          %291 = sbr.rel (%p289) target = $region28
        $region27: #{tpu_custom_call.1} parent=15 // pred_region
          %p292 = scmp.lt.s32.totalorder %s40, 2
          %s293 = scalar_select %p292, %s40, 2
          %s294 = scalar_lea.vmem %s3, %s293
        $region28: #{tpu_custom_call.1} parent=15 // pred_fallthru
          _
        // Predicated region
        $region29: #{tpu_custom_call.1} parent=15 // pred_check
          %p295 = pneg %p144
        $region30: #{tpu_custom_call.1} parent=15 // pred_check_branch
          %297 = sbr.rel (%p295) target = $region32
        $region31: #{tpu_custom_call.1} parent=15 // pred_region
          %p298 = scmp.lt.s32.totalorder %s40, 2
          %s299 = scalar_select %p298, %s40, 2
          %p300 = scmp.lt.s32.totalorder %s39, 1
          %s301 = scalar_select %p300, %s39, 1
          %s302 = smul.addr %s301, 2
          %s303 = smul.addr %s299, 4
          %s304 = sadd.s32 %s302, %s303
          %s305 = smul.addr %s304, 4
          %s306 = scalar_lea.vmem %s4, %s305
        $region32: #{tpu_custom_call.1} parent=15 // pred_fallthru
          _
        // Predicated region
        $region33: #{tpu_custom_call.1} parent=15 // pred_check
          %p307 = pneg %p172
        $region34: #{tpu_custom_call.1} parent=15 // pred_check_branch
          %309 = sbr.rel (%p307) target = $region36
        $region35: #{tpu_custom_call.1} parent=15 // pred_region
          %s310 = sand.u32 %s162, 1
          %s311 = scalar_lea.sflag [#allocation6], %s310
          %s312 = sand.u32 %s162, 1
          %s313 = smul.addr %s312, 256
          %s314 = scalar_lea.vmem [#allocation5], %s313
          %s315 = sld [smem:[#allocation4 + %s39]]
          %317 = vsyncadd %s311, 0
          %s318 = smul.addr %s315, 32
          %s319 = smul.addr %s318, 8
          %s320 = scalar_lea.hbm %s5, %s319
          %s321 = sshll.u32 %s320, 4
          %s322 = int_to_ptr.hbm [resolvable:$true] %s321
          %s323 = sshll.u32 %s314, 4
          %s324 = int_to_ptr.vmem [resolvable:$true] %s323
          %329 = dma.hbm_to_vmem [thread:$0]  %s322, 4096, %s324, %s311, 256, 256, 16
        $region36: #{tpu_custom_call.1} parent=15 // pred_fallthru
          _
        // Predicated region
        $region37: #{tpu_custom_call.1} parent=15 // pred_check
          %p330 = pneg %p200
        $region38: #{tpu_custom_call.1} parent=15 // pred_check_branch
          %332 = sbr.rel (%p330) target = $region40
        $region39: #{tpu_custom_call.1} parent=15 // pred_region
          %s333 = sld [smem:[#allocation4 + %s39]]
          %p334 = scmp.lt.s32.totalorder %s333, 1
          %s335 = scalar_select %p334, %s333, 1
          %s336 = smul.addr %s335, 2
          %s337 = scalar_lea.vmem %s6, %s336
          %s338 = sld [smem:[#allocation4 + %s39]]
        $region40: #{tpu_custom_call.1} parent=15 // pred_fallthru
          _
      $region16: #{tpu_custom_call.1} parent=5 // pred_fallthru
        _
      %p339 = scmp.le.s32.totalorder 1, %s32
      %p340 = scmp.lt.s32.totalorder %s32, 7
      %p341 = pnand %p339, %p340
      %p342 = pneg %p341
      // Predicated region
      $region41: #{tpu_custom_call.1} parent=5 // pred_check
        _
      $region42: #{tpu_custom_call.1} parent=5 // pred_check_branch
        %344 = sbr.rel (%p341) target = $region44
      $region43: #{tpu_custom_call.1} parent=5 // pred_region
        %s345 = ssub.s32 %s32, 1
        %s346 = sand.u32 %s165, 1
        %s347 = scalar_lea.sflag [#allocation6], %s346
        %s348 = sand.u32 %s165, 1
        %s349 = smul.addr %s348, 256
        %s350 = scalar_lea.vmem [#allocation5], %s349
        // Predicated region
        $region45: #{tpu_custom_call.1} parent=43 // pred_check
          %p351 = pneg %p178
        $region46: #{tpu_custom_call.1} parent=43 // pred_check_branch
          %353 = sbr.rel (%p351) target = $region48
        $region47: #{tpu_custom_call.1} parent=43 // pred_region
          %355 = dma.done %s347, 4096
        $region48: #{tpu_custom_call.1} parent=43 // pred_fallthru
          _
        %p356 = scmp.lt.s32.totalorder %s41, 1
        %s357 = scalar_select %p356, %s41, 1
        %s358 = scalar_lea.vmem %s1, %s357
        %p359 = pneg %p70
        %p360 = pneg %p67
        %p361 = scmp.lt.s32.totalorder %s42, 2
        %s362 = scalar_select %p361, %s42, 2
        %s363 = scalar_lea.vmem %s2, %s362
        %p364 = pneg %p96
        %p365 = pneg %p93
        %p366 = scmp.lt.s32.totalorder %s42, 2
        %s367 = scalar_select %p366, %s42, 2
        %s368 = scalar_lea.vmem %s3, %s367
        %p369 = pneg %p122
        %p370 = pneg %p119
        %p371 = scmp.lt.s32.totalorder %s42, 2
        %s372 = scalar_select %p371, %s42, 2
        %p373 = scmp.lt.s32.totalorder %s41, 1
        %s374 = scalar_select %p373, %s41, 1
        %s375 = smul.addr %s374, 2
        %s376 = smul.addr %s372, 4
        %s377 = sadd.s32 %s375, %s376
        %s378 = smul.addr %s377, 4
        %s379 = scalar_lea.vmem %s4, %s378
        %p380 = pneg %p150
        %p381 = pneg %p147
        %s382 = sand.u32 %s165, 1
        %s383 = scalar_lea.sflag [#allocation6], %s382
        %s384 = sand.u32 %s165, 1
        %s385 = smul.addr %s384, 256
        %s386 = scalar_lea.vmem [#allocation5], %s385
        %p387 = pneg %p178
        %p388 = pneg %p175
        %s389 = sld [smem:[#allocation4 + %s41]]
        %p390 = scmp.lt.s32.totalorder %s389, 1
        %s391 = scalar_select %p390, %s389, 1
        %s392 = smul.addr %s391, 2
        %s393 = scalar_lea.vmem %s6, %s392
        %p394 = pneg %p206
        %p395 = pneg %p203
        %p396 = pneg %p232
        %p397 = pneg %p229
        %s398 = sand.u32 %s219, 1
        %s399 = scalar_lea.sflag [#allocation7], %s398
        %s400 = sand.u32 %s219, 1
        %s401 = smul.addr %s400, 8
        %s402 = scalar_lea.vmem [#allocation8], %s401
        %p403 = pneg %p258
        %p404 = pneg %p255
        %s405 = sand.u32 %s245, 1
        %s406 = scalar_lea.sflag [#allocation10], %s405
        %s407 = sand.u32 %s245, 1
        %s408 = smul.addr %s407, 16
        %s409 = scalar_lea.vmem [#allocation9], %s408
        %p410 = scmp.lt.s32.totalorder %s41, 1
        %s411 = scalar_select %p410, %s41, 1
        %s412 = scalar_lea.vmem %s1, %s411
        %p413 = scmp.lt.s32.totalorder %s42, 2
        %s414 = scalar_select %p413, %s42, 2
        %s415 = scalar_lea.vmem %s2, %s414
        %p416 = scmp.lt.s32.totalorder %s42, 2
        %s417 = scalar_select %p416, %s42, 2
        %s418 = scalar_lea.vmem %s3, %s417
        %p419 = scmp.lt.s32.totalorder %s42, 2
        %s420 = scalar_select %p419, %s42, 2
        %p421 = scmp.lt.s32.totalorder %s41, 1
        %s422 = scalar_select %p421, %s41, 1
        %s423 = smul.addr %s422, 2
        %s424 = smul.addr %s420, 4
        %s425 = sadd.s32 %s423, %s424
        %s426 = smul.addr %s425, 4
        %s427 = scalar_lea.vmem %s4, %s426
        %s428 = sld [smem:[#allocation4 + %s41]]
        %s429 = sld [smem:[#allocation4 + %s41]]
        %p430 = scmp.lt.s32.totalorder %s429, 1
        %s431 = scalar_select %p430, %s429, 1
        %s432 = smul.addr %s431, 2
        %s433 = scalar_lea.vmem %s6, %s432
        %s434 = sld [smem:[#allocation4 + %s41]]
        %v435 = vld [vmem:[%s427] sm:$0xf]
        %v436 = vld [vmem:[%s427 + $0x4] sm:$0x1]
        %v437 = vunpack.c.l.bf16 %v435
        %v438 = vunpack.c.l.bf16 %v436
        %439 = vadd.xlane.f32.xlu0 %v437
        %v440 = vpop.xlane.xlu0 %439
        %vm441 = vcmask 1041408
        %v442 = vsel %vm441, %v438, 0.0
        %443 = vadd.xlane.f32.xlu0 %v442
        %v444 = vpop.xlane.xlu0 %443
        %v445 = vmul.f32 %v440, 0.0078125
        %v446 = vmul.f32 %v444, 0.0078125
        %v447 = vsub.f32 %v437, %v445
        %v448 = vsub.f32 %v438, %v446
        %v449 = vmul.f32 %v447, %v447
        %v450 = vmul.f32 %v448, %v448
        %451 = vadd.xlane.f32.xlu0 %v449
        %v452 = vpop.xlane.xlu0 %451
        %v453 = vsel %vm441, %v450, 0.0
        %454 = vadd.xlane.f32.xlu0 %v453
        %v455 = vpop.xlane.xlu0 %454
        %v456 = vmul.f32 %v452, 0.0078125
        %v457 = vmul.f32 %v455, 0.0078125
        %v458 = vadd.f32 %v456, 1e-05
        %v459 = vadd.f32 %v457, 1e-05
        %v460 = vrsqrt.pop %v458
        %v461 = vmul.f32 %v460, %v458
        %v462 = vmul.f32 %v461, %v460
        %v463 = vmul.f32 0.5, %v462
        %v464 = vsub.f32 1.5, %v463
        %v465 = vmul.f32 %v460, %v464
        %vm466 = vweird.f32 %v458
        %vm467 = vweird.f32 %v460
        %vm468 = vmor %vm466, %vm467
        %v469 = vsel %vm468, %v460, %v465
        %v470 = vrsqrt.pop %v459
        %v471 = vmul.f32 %v470, %v459
        %v472 = vmul.f32 %v471, %v470
        %v473 = vmul.f32 0.5, %v472
        %v474 = vsub.f32 1.5, %v473
        %v475 = vmul.f32 %v470, %v474
        %vm476 = vweird.f32 %v459
        %vm477 = vweird.f32 %v470
        %vm478 = vmor %vm476, %vm477
        %v479 = vsel %vm478, %v470, %v475
        %v480 = vmul.f32 %v447, %v469
        %v481 = vmul.f32 %v448, %v479
        %v482 = vld [vmem:[%s415] sm:$0x1]
        %v484 = vperm.slane %v482, 0
        %v486 = vmul.f32 %v480, %v484
        %v487 = vmul.f32 %v481, %v484
        %v488 = vld [vmem:[%s418] sm:$0x1]
        %v490 = vperm.slane %v488, 0
        %v492 = vadd.f32 %v486, %v490
        %v493 = vadd.f32 %v487, %v490
        %p494 = scmp.eq.s32.totalorder %s42, 0
        // Predicated region
        $region49: #{tpu_custom_call.1} parent=43 // pred_check
          %p495 = pneg %p494
        $region50: #{tpu_custom_call.1} parent=43 // pred_check_branch
          %497 = sbr.rel (%p495) target = $region52
        $region51: #{tpu_custom_call.1} parent=43 // pred_region
          %498 = vst [vmem:[#allocation2] sm:$0xff] %v492
          %499 = vst [vmem:[#allocation2 + $0x8] sm:$0x3] %v493
        $region52: #{tpu_custom_call.1} parent=43 // pred_fallthru
          _
        %p500 = scmp.gt.s32.totalorder %s42, 0
        // Predicated region
        $region53: #{tpu_custom_call.1} parent=43 // pred_check
          %p501 = pneg %p500
        $region54: #{tpu_custom_call.1} parent=43 // pred_check_branch
          %503 = sbr.rel (%p501) target = $region56
        $region55: #{tpu_custom_call.1} parent=43 // pred_region
          %v504 = vld [vmem:[#allocation2] sm:$0xff]
          %v505 = vld [vmem:[#allocation2 + $0x8] sm:$0x3]
          %v506 = vadd.f32 %v504, %v492
          %v507 = vadd.f32 %v505, %v493
          %508 = vst [vmem:[#allocation2] sm:$0xff] %v506
          %509 = vst [vmem:[#allocation2 + $0x8] sm:$0x3] %v507
        $region56: #{tpu_custom_call.1} parent=43 // pred_fallthru
          _
        %p510 = scmp.eq.s32.totalorder %s42, 2
        // Predicated region
        $region57: #{tpu_custom_call.1} parent=43 // pred_check
          %p511 = pneg %p510
        $region58: #{tpu_custom_call.1} parent=43 // pred_check_branch
          %513 = sbr.rel (%p511) target = $region60
        $region59: #{tpu_custom_call.1} parent=43 // pred_region
          %v514 = vld [vmem:[#allocation2] sm:$0xff]
          %v515 = vld [vmem:[#allocation2 + $0x8] sm:$0x3]
          %v516 = vld [vmem:[%s412] sm:$0x1]
          %v517 = vlaneseq
          %v518 = vshrl.u32 %v517, 7
          %v519 = vperm.slane %v516, 0
          %vm520 = vcmp.eq.s32.totalorder %v518, %v519
          %v521 = vsel %vm520, 1, 0
          %v522 = vcvt.s32.f32 %v521
          %vm523 = vcmask 80896
          %v525 = vsel %vm523, %v522, 0
          %v528 = vsel %vm441, %v515, 0
          %530 = vmatpush.msra.mxu0 0.0
          %531 = vmatpush.msra.mxu0 0.0
          %532 = vmatpush.msra.mxu0 0.0
          %533 = vmatpush.msra.mxu0 0.0
          %534 = vmatpush.msra.mxu0 0.0
          %535 = vmatpush.msra.mxu0 0.0
          %536 = vmatpush.msra.mxu0 0.0
          %537 = vmatpush.msra.mxu0 0.0
          %538 = vmatpush.msra.mxu0 0.0
          %539 = vmatpush.msra.mxu0 0.0
          %540 = vmatpush.msra.mxu0 0.0
          %541 = vmatpush.msra.mxu0 0.0
          %542 = vmatpush.msra.mxu0 0.0
          %543 = vmatpush.msra.mxu0 0.0
          %544 = vmatpush.msra.mxu0 %v528
          %545 = vmatpush.msra.mxu0 %v514
          %546 = vmatmul.f32.gmra.mxu0 %v525
          %v547 = vpop.f32.mrf.mxu0
          %v548 = vadd.f32 0.0, %v547
          %549 = vdwg.mxu0
          %550 = vst [vmem:[%s402] sm:$0xff] %v548
          %v551 = vld [vmem:[%s350] sm:$0xff]
          %v552 = vld [vmem:[%s350 + $0x8] sm:$0xff]
          %v553 = vld [vmem:[%s350 + $0x10] sm:$0xff]
          %v554 = vld [vmem:[%s350 + $0x18] sm:$0xff]
          %v555 = vld [vmem:[%s350 + $0x20] sm:$0xff]
          %v556 = vld [vmem:[%s350 + $0x28] sm:$0xff]
          %v557 = vld [vmem:[%s350 + $0x30] sm:$0xff]
          %v558 = vld [vmem:[%s350 + $0x38] sm:$0xff]
          %v559 = vld [vmem:[%s350 + $0x40] sm:$0xff]
          %v560 = vld [vmem:[%s350 + $0x48] sm:$0xff]
          %v561 = vld [vmem:[%s350 + $0x50] sm:$0xff]
          %v562 = vld [vmem:[%s350 + $0x58] sm:$0xff]
          %v563 = vld [vmem:[%s350 + $0x60] sm:$0xff]
          %v564 = vld [vmem:[%s350 + $0x68] sm:$0xff]
          %v565 = vld [vmem:[%s350 + $0x70] sm:$0xff]
          %v566 = vld [vmem:[%s350 + $0x78] sm:$0xff]
          %v567 = vld [vmem:[%s350 + $0x80] sm:$0xff]
          %v568 = vld [vmem:[%s350 + $0x88] sm:$0xff]
          %v569 = vld [vmem:[%s350 + $0x90] sm:$0xff]
          %v570 = vld [vmem:[%s350 + $0x98] sm:$0xff]
          %v571 = vld [vmem:[%s350 + $0xa0] sm:$0xff]
          %v572 = vld [vmem:[%s350 + $0xa8] sm:$0xff]
          %v573 = vld [vmem:[%s350 + $0xb0] sm:$0xff]
          %v574 = vld [vmem:[%s350 + $0xb8] sm:$0xff]
          %v575 = vld [vmem:[%s350 + $0xc0] sm:$0xff]
          %v576 = vld [vmem:[%s350 + $0xc8] sm:$0xff]
          %v577 = vld [vmem:[%s350 + $0xd0] sm:$0xff]
          %v578 = vld [vmem:[%s350 + $0xd8] sm:$0xff]
          %v579 = vld [vmem:[%s350 + $0xe0] sm:$0xff]
          %v580 = vld [vmem:[%s350 + $0xe8] sm:$0xff]
          %v581 = vld [vmem:[%s350 + $0xf0] sm:$0xff]
          %v582 = vld [vmem:[%s350 + $0xf8] sm:$0xff]
          %v583 = vld [vmem:[%s433] sm:$0x3]
          %v585 = vperm.slane %v583, 0
          %v586 = vperm.slane %v583, 1
          %589 = vmatpush.msra.mxu0 %v581
          %590 = vmatpush.msra.mxu0 %v579
          %591 = vmatpush.msra.mxu0 %v577
          %592 = vmatpush.msra.mxu0 %v575
          %593 = vmatpush.msra.mxu0 %v573
          %594 = vmatpush.msra.mxu0 %v571
          %595 = vmatpush.msra.mxu0 %v569
          %596 = vmatpush.msra.mxu0 %v567
          %597 = vmatpush.msra.mxu0 %v565
          %598 = vmatpush.msra.mxu0 %v563
          %599 = vmatpush.msra.mxu0 %v561
          %600 = vmatpush.msra.mxu0 %v559
          %601 = vmatpush.msra.mxu0 %v557
          %602 = vmatpush.msra.mxu0 %v555
          %603 = vmatpush.msra.mxu0 %v553
          %604 = vmatpush.msra.mxu0 %v551
          %605 = vmatmul.f32.gmra.mxu0 %v548
          %v606 = vpop.f32.mrf.mxu0
          %v607 = vadd.f32 %v585, %v606
          %608 = vdwg.mxu0
          %609 = vmatpush.msra.mxu0 %v582
          %610 = vmatpush.msra.mxu0 %v580
          %611 = vmatpush.msra.mxu0 %v578
          %612 = vmatpush.msra.mxu0 %v576
          %613 = vmatpush.msra.mxu0 %v574
          %614 = vmatpush.msra.mxu0 %v572
          %615 = vmatpush.msra.mxu0 %v570
          %616 = vmatpush.msra.mxu0 %v568
          %617 = vmatpush.msra.mxu0 %v566
          %618 = vmatpush.msra.mxu0 %v564
          %619 = vmatpush.msra.mxu0 %v562
          %620 = vmatpush.msra.mxu0 %v560
          %621 = vmatpush.msra.mxu0 %v558
          %622 = vmatpush.msra.mxu0 %v556
          %623 = vmatpush.msra.mxu0 %v554
          %624 = vmatpush.msra.mxu0 %v552
          %625 = vmatmul.f32.gmra.mxu0 %v548
          %v626 = vpop.f32.mrf.mxu0
          %v627 = vadd.f32 %v586, %v626
          %628 = vdwg.mxu0
          %v629 = vtanh.pop %v607
          %v630 = vtanh.pop %v627
          %631 = vst [vmem:[%s409] sm:$0xff] %v629
          %632 = vst [vmem:[%s409 + $0x8] sm:$0xff] %v630
        $region60: #{tpu_custom_call.1} parent=43 // pred_fallthru
          _
        %s633 = sand.u32 %s219, 1
        %s634 = scalar_lea.sflag [#allocation7], %s633
        %s635 = sand.u32 %s219, 1
        %s636 = smul.addr %s635, 8
        %s637 = scalar_lea.vmem [#allocation8], %s636
        %s638 = sand.u32 %s245, 1
        %s639 = scalar_lea.sflag [#allocation10], %s638
        %s640 = sand.u32 %s245, 1
        %s641 = smul.addr %s640, 16
        %s642 = scalar_lea.vmem [#allocation9], %s641
        // Predicated region
        $region61: #{tpu_custom_call.1} parent=43 // pred_check
          %p643 = pneg %p229
        $region62: #{tpu_custom_call.1} parent=43 // pred_check_branch
          %645 = sbr.rel (%p643) target = $region64
        $region63: #{tpu_custom_call.1} parent=43 // pred_region
          %647 = vsyncadd %s634, 0
          %s648 = smul.addr %s41, 8
          %s649 = scalar_lea.hbm %s7, %s648
          %s651 = sshll.u32 %s637, 4
          %s652 = int_to_ptr.vmem [resolvable:$true] %s651
          %s653 = sshll.u32 %s649, 4
          %s654 = int_to_ptr.hbm [resolvable:$true] %s653
          %656 = dma.vmem_to_hbm [thread:$0]  %s652, 128, %s654, %s634
        $region64: #{tpu_custom_call.1} parent=43 // pred_fallthru
          _
        // Predicated region
        $region65: #{tpu_custom_call.1} parent=43 // pred_check
          %p657 = pneg %p255
        $region66: #{tpu_custom_call.1} parent=43 // pred_check_branch
          %659 = sbr.rel (%p657) target = $region68
        $region67: #{tpu_custom_call.1} parent=43 // pred_region
          %661 = vsyncadd %s639, 0
          %s662 = smul.addr %s41, 2
          %s663 = smul.addr %s662, 8
          %s664 = scalar_lea.hbm %s8, %s663
          %s666 = sshll.u32 %s642, 4
          %s667 = int_to_ptr.vmem [resolvable:$true] %s666
          %s668 = sshll.u32 %s664, 4
          %s669 = int_to_ptr.hbm [resolvable:$true] %s668
          %671 = dma.vmem_to_hbm [thread:$0]  %s667, 256, %s669, %s639
        $region68: #{tpu_custom_call.1} parent=43 // pred_fallthru
          _
      $region44: #{tpu_custom_call.1} parent=5 // pred_fallthru
        _
      %p672 = scmp.le.s32.totalorder 2, %s32
      // Predicated region
      $region69: #{tpu_custom_call.1} parent=5 // pred_check
        %p673 = pneg %p672
      $region70: #{tpu_custom_call.1} parent=5 // pred_check_branch
        %675 = sbr.rel (%p673) target = $region72
      $region71: #{tpu_custom_call.1} parent=5 // pred_region
        %s676 = ssub.s32 %s32, 2
        // Predicated region
        $region73: #{tpu_custom_call.1} parent=71 // pred_check
          %p677 = pneg %p235
        $region74: #{tpu_custom_call.1} parent=71 // pred_check_branch
          %679 = sbr.rel (%p677) target = $region76
        $region75: #{tpu_custom_call.1} parent=71 // pred_region
          %s680 = sand.u32 %s220, 1
          %s681 = scalar_lea.sflag [#allocation7], %s680
          %s682 = sand.u32 %s220, 1
          %s683 = smul.addr %s682, 8
          %s684 = scalar_lea.vmem [#allocation8], %s683
          %686 = dma.done %s681, 128
        $region76: #{tpu_custom_call.1} parent=71 // pred_fallthru
          _
        // Predicated region
        $region77: #{tpu_custom_call.1} parent=71 // pred_check
          %p687 = pneg %p261
        $region78: #{tpu_custom_call.1} parent=71 // pred_check_branch
          %689 = sbr.rel (%p687) target = $region80
        $region79: #{tpu_custom_call.1} parent=71 // pred_region
          %s690 = sand.u32 %s246, 1
          %s691 = scalar_lea.sflag [#allocation10], %s690
          %s692 = sand.u32 %s246, 1
          %s693 = smul.addr %s692, 16
          %s694 = scalar_lea.vmem [#allocation9], %s693
          %696 = dma.done %s691, 256
        $region80: #{tpu_custom_call.1} parent=71 // pred_fallthru
          _
      $region72: #{tpu_custom_call.1} parent=5 // pred_fallthru
        _
    $region6: #{tpu_custom_call.1} parent=1 // loop_footer
      %s36 = sadd.s32 1, %s32
    $region7: #{tpu_custom_call.1} parent=1 // loop_footer_branch
      %31 = sbr.rel target = $region3
    $region8: #{tpu_custom_call.1} parent=1 // loop_exit
      _
    %697 = vsyncpa [#allocation6], 1
    %s698 = scalar_lea.sflag [#allocation6], 1
    %699 = vsyncpa %s698, 1
    %700 = vsyncpa [#allocation7], 1
    %s701 = scalar_lea.sflag [#allocation7], 1
    %702 = vsyncpa %s701, 1
    %703 = vsyncpa [#allocation10], 1
    %s704 = scalar_lea.sflag [#allocation10], 1
    %705 = vsyncpa %s704, 1

</llo_original>
